<compile_context>
chip_gen: v6e
topology: v6e:2x2x1
jax: 0.10.0
libtpu: 0.0.40
codegen_flags: <defaults>
</compile_context>

<pallas_src>
import functools

import jax
import jax.numpy as jnp
from jax.experimental import pallas as pl
from jax.experimental.pallas import tpu as pltpu


def _gather_kernel(ids_ref, table_hbm, out_ref, row_buf, copy_sems):
    # ids_ref:   SMEM int32 (B_pad,)   -- flat row indices (scalar prefetch)
    # table_hbm: HBM   (N, D)          -- full table, never copied wholesale
    # out_ref:   VMEM  (TB, D)         -- output block for this grid step
    # row_buf:   VMEM  (TB, D)         -- gather landing buffer
    # copy_sems: DMA semaphores        -- one per in-flight row copy
    tb = out_ref.shape[0]
    base = pl.program_id(0) * tb

    # Issue all TB row DMAs back-to-back so they overlap in the DMA engine.
    @pl.loop(0, tb)
    def _issue(r):
        row = ids_ref[base + r]
        pltpu.make_async_copy(
            table_hbm.at[row], row_buf.at[r], copy_sems.at[r]).start()

    # Drain every row before touching the buffer.
    @pl.loop(0, tb)
    def _drain(r):
        pltpu.make_async_copy(
            table_hbm.at[0], row_buf.at[r], copy_sems.at[r]).wait()

    # One dense (TB, D) store into the pipelined output block.
    out_ref[...] = row_buf[...]


def _round_up(x, m):
    return ((x + m - 1) // m) * m


@functools.partial(jax.jit, static_argnames=("block_b",))
def relation_encoder_forward(table, flat_ids, *, block_b=128):
    """Gather rows of `table` ([N, D]) at `flat_ids` ([B] int32) -> [B, D]."""
    N, D = table.shape
    B = int(flat_ids.shape[0])
    if B == 0:  # guard the empty-batch case
        return jnp.zeros((0, D), dtype=table.dtype)

    itemsize = table.dtype.itemsize
    # Sublane quantum of the output dtype (f32 -> 8 rows/vreg, bf16 -> 16).
    row_quant = 16 if table.dtype == jnp.bfloat16 else 8
    TB = max(row_quant, min(int(block_b), _round_up(B, row_quant)))
    TB = _round_up(TB, row_quant)
    num_blocks = pl.cdiv(B, TB)
    B_pad = num_blocks * TB

    # Clamp (matches jnp gather / table[flat_ids] semantics for bad indices)
    # and pad to whole blocks; padded slots fetch row 0 and are sliced off.
    ids = jnp.clip(flat_ids.astype(jnp.int32), 0, N - 1)
    ids = jnp.zeros((B_pad,), jnp.int32).at[:B].set(ids)

    # Memory-bound gather: no FLOPs, ~2*B*D bytes moved (+ the id vector).
    cost = pl.CostEstimate(
        flops=0,
        transcendentals=0,
        bytes_accessed=2 * B_pad * D * itemsize + B_pad * 4,
    )

    grid_spec = pltpu.PrefetchScalarGridSpec(
        num_scalar_prefetch=1,                      # ids -> SMEM
        grid=(num_blocks,),
        in_specs=[pl.BlockSpec(memory_space=pl.ANY)],   # table stays in HBM
        out_specs=pl.BlockSpec((TB, D), lambda i, ids_ref: (i, 0)),
        scratch_shapes=[
            pltpu.VMEM((TB, D), table.dtype),       # row landing buffer
            pltpu.SemaphoreType.DMA((TB,)),         # one sem per row copy
        ],
    )

    # TODO(synk): if D is not a multiple of 128, pad dim_rel at table-build
    # time for fully lane-dense output stores (works correctly either way).
    out = pl.pallas_call(
        _gather_kernel,
        out_shape=jax.ShapeDtypeStruct((B_pad, D), table.dtype),
        grid_spec=grid_spec,
        compiler_params=pltpu.CompilerParams(
            dimension_semantics=("parallel",),      # independent batch blocks
        ),
        cost_estimate=cost,
    )(ids, table)
    return out[:B]


def build_embedding_table(arities, dim_rel, key):
    """Deterministically build the flattened embedding table.

    Row layout: rows for relation i_r occupy
    [offset[i_r], offset[i_r] + arities[i_r]), offset = cumsum of arities.
    Matches nn.init.normal_(std=1/sqrt(dim_rel)).
    """
    n_rows = sum(arities)
    table = jax.random.normal(key, (n_rows, dim_rel), dtype=jnp.float32)
    table = table * (1.0 / (dim_rel ** 0.5))
    offsets = [0]
    for a in arities:
        offsets.append(offsets[-1] + a)
    return table, offsets[:-1]


def flatten_rels(batch_rels, offsets):
    """Map list of (relation_index, arg_position) tuples -> flat row indices."""
    return jnp.asarray([offsets[i_r] + i_emb for (i_r, i_emb) in batch_rels],
                       dtype=jnp.int32)


if __name__ == "__main__":
    # Small, deterministic example consistent with the module's __init__.
    arities = [2, 3, 1]          # 3 relations, arities 2+3+1 -> 6 embeddings
    dim_rel = 128                # lane-friendly embedding width

    key = jax.random.PRNGKey(0)
    table, offsets = build_embedding_table(arities, dim_rel, key)

    # A batch of singularized relations (relation index, arg position).
    # 11 rows -> exercises padding to the sublane quantum.
    batch_rels = [(0, 0), (1, 2), (2, 0), (0, 1), (1, 0), (1, 1),
                  (2, 0), (0, 0), (1, 2), (0, 1), (2, 0)]
    flat_ids = flatten_rels(batch_rels, offsets)
    ref = table[flat_ids]

    # Default block size (single grid step here).
    out = relation_encoder_forward(table, flat_ids)
    out = jax.block_until_ready(out)
    assert out.shape == (len(batch_rels), dim_rel)
    assert jnp.allclose(out, ref), "Pallas gather mismatch vs reference"

    # Small block size -> multiple grid steps, exercises block indexing.
    out2 = relation_encoder_forward(table, flat_ids, block_b=8)
    out2 = jax.block_until_ready(out2)
    assert jnp.allclose(out2, ref), "Pallas gather mismatch (block_b=8)"

    print("KERNEL_OK")
</pallas_src>

<mosaic_0001>
module attributes {stable_mosaic.version = 11 : i64} {
  func.func @_gather_kernel(%arg0: i32, %arg1: memref<16xi32, #tpu.memory_space<smem>>, %arg2: memref<6x128xf32, #tpu.memory_space<any>>, %arg3: memref<16x128xf32, #tpu.memory_space<vmem>>, %arg4: memref<16x128xf32, #tpu.memory_space<vmem>>, %arg5: memref<16x!tpu.dma_semaphore, #tpu.memory_space<semaphore_mem>>) attributes {dimension_semantics = [#tpu.dimension_semantics<parallel>], iteration_bounds = array<i64: 1>, scalar_prefetch = 1 : i64, scratch_operands = 2 : i64, tpu.core_type = #tpu.core_type<tc>, window_params = [{}, {transform_indices = @transform_1, window_bounds = array<i64: 16, 128>}]} {
    %c16_i32 = arith.constant 16 : i32
    %0 = arith.muli %arg0, %c16_i32 : i32
    %c0_i32 = arith.constant 0 : i32
    %c16_i32_0 = arith.constant 16 : i32
    %1 = arith.addi %c0_i32, %c16_i32_0 : i32
    %c1_i32 = arith.constant 1 : i32
    scf.for %arg6 = %c0_i32 to %1 step %c1_i32  : i32 {
      %c1_i32_9 = arith.constant 1 : i32
      %5 = arith.muli %arg6, %c1_i32_9 : i32
      %c0_i32_10 = arith.constant 0 : i32
      %6 = arith.addi %c0_i32_10, %5 : i32
      %7 = arith.addi %0, %6 : i32
      %8 = arith.index_cast %7 : i32 to index
      %9 = memref.load %arg1[%8] : memref<16xi32, #tpu.memory_space<smem>>
      %c0_i32_11 = arith.constant 0 : i32
      %10 = tpu.memref_slice %arg2[%9, %c0_i32_11] : memref<6x128xf32, #tpu.memory_space<any>> -> memref<1x128xf32, #tpu.memory_space<any>>
      %11 = tpu.memref_squeeze %10 : memref<1x128xf32, #tpu.memory_space<any>> -> memref<128xf32, #tpu.memory_space<any>>
      %c0_i32_12 = arith.constant 0 : i32
      %12 = tpu.memref_slice %arg4[%6, %c0_i32_12] : memref<16x128xf32, #tpu.memory_space<vmem>> -> memref<1x128xf32, #tpu.memory_space<vmem>>
      %13 = tpu.memref_squeeze %12 : memref<1x128xf32, #tpu.memory_space<vmem>> -> memref<128xf32, #tpu.memory_space<vmem>>
      %14 = tpu.memref_slice %arg5[%6] : memref<16x!tpu.dma_semaphore, #tpu.memory_space<semaphore_mem>> -> memref<1x!tpu.dma_semaphore, #tpu.memory_space<semaphore_mem>>
      %15 = tpu.memref_squeeze %14 : memref<1x!tpu.dma_semaphore, #tpu.memory_space<semaphore_mem>> -> memref<!tpu.dma_semaphore, #tpu.memory_space<semaphore_mem>>
      tpu.enqueue_dma source(%11 : memref<128xf32, #tpu.memory_space<any>>) target(%13 : memref<128xf32, #tpu.memory_space<vmem>>) target_semaphore(%15 : memref<!tpu.dma_semaphore, #tpu.memory_space<semaphore_mem>>)
    }
    %c16_i32_1 = arith.constant 16 : i32
    %c0_i32_2 = arith.constant 0 : i32
    %c16_i32_3 = arith.constant 16 : i32
    %2 = arith.addi %c0_i32_2, %c16_i32_3 : i32
    %c1_i32_4 = arith.constant 1 : i32
    scf.for %arg6 = %c0_i32_2 to %2 step %c1_i32_4  : i32 {
      %c1_i32_9 = arith.constant 1 : i32
      %5 = arith.muli %arg6, %c1_i32_9 : i32
      %c0_i32_10 = arith.constant 0 : i32
      %6 = arith.addi %c0_i32_10, %5 : i32
      %c0_i32_11 = arith.constant 0 : i32
      %c0_i32_12 = arith.constant 0 : i32
      %7 = tpu.memref_slice %arg2[%c0_i32_11, %c0_i32_12] : memref<6x128xf32, #tpu.memory_space<any>> -> memref<1x128xf32, #tpu.memory_space<any>>
      %8 = tpu.memref_squeeze %7 : memref<1x128xf32, #tpu.memory_space<any>> -> memref<128xf32, #tpu.memory_space<any>>
      %c0_i32_13 = arith.constant 0 : i32
      %9 = tpu.memref_slice %arg4[%6, %c0_i32_13] : memref<16x128xf32, #tpu.memory_space<vmem>> -> memref<1x128xf32, #tpu.memory_space<vmem>>
      %10 = tpu.memref_squeeze %9 : memref<1x128xf32, #tpu.memory_space<vmem>> -> memref<128xf32, #tpu.memory_space<vmem>>
      %11 = tpu.memref_slice %arg5[%6] : memref<16x!tpu.dma_semaphore, #tpu.memory_space<semaphore_mem>> -> memref<1x!tpu.dma_semaphore, #tpu.memory_space<semaphore_mem>>
      %12 = tpu.memref_squeeze %11 : memref<1x!tpu.dma_semaphore, #tpu.memory_space<semaphore_mem>> -> memref<!tpu.dma_semaphore, #tpu.memory_space<semaphore_mem>>
      tpu.wait_dma2 semaphore(%12 : memref<!tpu.dma_semaphore, #tpu.memory_space<semaphore_mem>>) src(%8 : memref<128xf32, #tpu.memory_space<any>>) dst(%10 : memref<128xf32, #tpu.memory_space<vmem>>)
    }
    %c16_i32_5 = arith.constant 16 : i32
    %c0 = arith.constant 0 : index
    %c0_6 = arith.constant 0 : index
    %3 = vector.load %arg4[%c0, %c0_6] : memref<16x128xf32, #tpu.memory_space<vmem>>, vector<16x128xf32>
    %c0_7 = arith.constant 0 : index
    %c0_8 = arith.constant 0 : index
    %4 = vector.load %arg3[%c0_7, %c0_8] : memref<16x128xf32, #tpu.memory_space<vmem>>, vector<16x128xf32>
    tpu.vector_store %arg3[%c0_7, %c0_8], %3 {strides = array<i32>} : memref<16x128xf32, #tpu.memory_space<vmem>>, vector<16x128xf32>,
    return
  }
  func.func @transform_1(%arg0: i32, %arg1: memref<16xi32, #tpu.memory_space<smem>>) -> (i32, i32) {
    %c0_i32 = arith.constant 0 : i32
    %c0_i32_0 = arith.constant 0 : i32
    return %arg0, %c0_i32 : i32, i32
  }
}

</mosaic_0001>

<llo_original>
// kernel: relation_encoder_forward.1
$region0: #{relation_encoder_forward.1}
  #allocation0 [shape = 'u32[]', space=smem, size = 0x4, offset = 0x4, fixed_abs, tag = 'smem constant byte address 0x4 - core index']
  #allocation1 [shape = 'u32[144,128]{1,0:T(1,128)}', space=vmem, size = 0x12000, scoped, tag = 'internal scratch']
  #allocation2 [shape = 'f32[16,128]{1,0:T(8,128)}', space=vmem, size = 0x2000, scoped, tag = 'scratch operand']
  #allocation3 [shape = 's32[16]{0}', space=sflag, size = 0x40, scoped, tag = 'scratch operand']
  #allocation4 [shape = 's32[1]{0}', space=sflag, size = 0x4, scoped, tag = 'scoped memory for relation_encoder_forward.1']
  #allocation5 [shape = 'u8[512]{0}', space=smem, size = 0x200, scoped, tag = 'prefetched SMEM operand 0']
  #allocation8 [shape = 's32[]', space=sflag, size = 0x4, offset = 0, fixed_abs, tag = 'sflag constant byte address 0x0 - dummy sync flag']
  #allocation9 [shape = 's32[]', space=sflag, size = 0x4, offset = 0, fixed_abs, tag = 'sflag constant byte address 0x0 - dummy sync flag']
  #allocation10 [shape = 'u32[]', space=smem, size = 0x4, offset = 0x44, fixed_abs, tag = 'smem constant byte address 0x44 - assertion arg 0']
  #allocation11 [shape = 'u32[]', space=smem, size = 0x4, offset = 0x48, fixed_abs, tag = 'smem constant byte address 0x48 - assertion arg 1']
  %s0 = inlined_call_operand.vmem [shape: s32[16], index: 0, kind: input, shape index: {}]
  %s1 = inlined_call_operand.hbm [shape: f32[6,128], index: 1, kind: input, shape index: {}]
  %s2 = inlined_call_operand.hbm [shape: f32[16,128], index: 2, kind: output, shape index: {}]
  %s3 = sld [smem:[#allocation0]]
  $region28: #{relation_encoder_forward.1} parent=0
    _
  %s5 = ssub.s32 1, %s3
  %s6 = scalar_select 0, %s5, %s3
  %s7 = sshll.u32 %s0, 4
  %s8 = int_to_ptr.vmem [resolvable:$true] %s7
  %10 = dma.vmem_to_smem %s8, 16, [#allocation5], [#allocation4]
  %11 = dma.done [#allocation4], 16
  %12 = sfence
  $region1: #{relation_encoder_forward.1} parent=0
    #allocation6 [shape = 'u8[8192]{0}', space=vmem, size = 0x2000, scoped, tag = 'output window, operand 0, single buffered']
    #allocation7 [shape = 's32[1]{0}', space=sflag, size = 0x4, scoped, tag = 'scoped memory for relation_encoder_forward.1']
    %13 = vsyncpa [#allocation7], 0
    %s14 = smul.u32 0, 16
    loop: start=0, step=1, limit=16
    $region2: #{relation_encoder_forward.1} parent=1 // loop_pre_header
      _
    $region3: #{relation_encoder_forward.1} parent=1 // loop_header
      %s16 = sphi 0, %s20
      %p17 = scmp.ge.s32.totalorder %s16, 16
    $region4: #{relation_encoder_forward.1} parent=1 // loop_header_branch
      %19 = sbr.rel (%p17) target = $region8
    $region5: #{relation_encoder_forward.1} parent=1 // loop_body
      %s21 = sadd.s32 %s14, %s16
      %s22 = sld [smem:[#allocation5 + %s21]]
      %s23 = smul.addr %s22, 16
      %s24 = scalar_lea.hbm %s1, %s23
      %s25 = scalar_lea.vmem [#allocation2], %s16
      %s26 = scalar_lea.sflag [#allocation3], %s16
      // Predicated region
      $region9: #{relation_encoder_forward.1} parent=5 // pred_check
        _
      $region10: #{relation_encoder_forward.1} parent=5 // pred_check_branch
        %28 = sbr.rel target = $region12
      $region11: #{relation_encoder_forward.1} parent=5 // pred_region
        %29 = sst [smem:[#allocation10]] [#allocation9]
        %30 = sst [smem:[#allocation11]] [#allocation8]
      $region12: #{relation_encoder_forward.1} parent=5 // pred_fallthru
        _
      %32 = shalt.err (0)
      %s34 = sshll.u32 %s25, 4
      %s35 = int_to_ptr.vmem [resolvable:$true] %s34
      %37 = dma.hbm_to_vmem [thread:$0]  %s24, 16, %s35, %s26
    $region6: #{relation_encoder_forward.1} parent=1 // loop_footer
      %s20 = sadd.s32 1, %s16
    $region7: #{relation_encoder_forward.1} parent=1 // loop_footer_branch
      %15 = sbr.rel target = $region3
    $region8: #{relation_encoder_forward.1} parent=1 // loop_exit
      _
    loop: start=0, step=1, limit=16
    $region13: #{relation_encoder_forward.1} parent=1 // loop_pre_header
      _
    $region14: #{relation_encoder_forward.1} parent=1 // loop_header
      %s39 = sphi 0, %s43
      %p40 = scmp.ge.s32.totalorder %s39, 16
    $region15: #{relation_encoder_forward.1} parent=1 // loop_header_branch
      %42 = sbr.rel (%p40) target = $region19
    $region16: #{relation_encoder_forward.1} parent=1 // loop_body
      %s44 = scalar_lea.sflag [#allocation3], %s39
      %46 = dma.done %s44, 16
    $region17: #{relation_encoder_forward.1} parent=1 // loop_footer
      %s43 = sadd.s32 1, %s39
    $region18: #{relation_encoder_forward.1} parent=1 // loop_footer_branch
      %38 = sbr.rel target = $region14
    $region19: #{relation_encoder_forward.1} parent=1 // loop_exit
      _
    %v47 = vld [vmem:[#allocation2] sm:$0xff]
    %v48 = vld [vmem:[#allocation2 + $0x8] sm:$0xff]
    %49 = vst [vmem:[#allocation6] sm:$0xff] %v47
    %50 = vst [vmem:[#allocation6 + $0x8] sm:$0xff] %v48
    // Predicated region
    $region20: #{relation_encoder_forward.1} parent=1 // pred_check
      _
    $region21: #{relation_encoder_forward.1} parent=1 // pred_check_branch
      %52 = sbr.rel (0) target = $region23
    $region22: #{relation_encoder_forward.1} parent=1 // pred_region
      %s54 = ssub.s32 256, 256
      %55 = vsyncadd [#allocation7], %s54
      %s56 = sshll.u32 [#allocation6], 4
      %s57 = int_to_ptr.vmem [resolvable:$true] %s56
      %62 = dma.vmem_to_hbm [thread:$0]  %s57, 256, %s2, [#allocation7], 128, 128, 8
    $region23: #{relation_encoder_forward.1} parent=1 // pred_fallthru
      _
    // Predicated region
    $region24: #{relation_encoder_forward.1} parent=1 // pred_check
      _
    $region25: #{relation_encoder_forward.1} parent=1 // pred_check_branch
      %64 = sbr.rel (0) target = $region27
    $region26: #{relation_encoder_forward.1} parent=1 // pred_region
      %65 = dma.done [#allocation7], 256
    $region27: #{relation_encoder_forward.1} parent=1 // pred_fallthru
      _
    %66 = vsyncpa [#allocation7], 1
  %67 = vsyncmov [#allocation3]
  %s68 = vpop.sfrf %67
  %p69 = scmp.eq.s32.totalorder %s68, 0
  %p70 = pneg %p69
  %72 = shalt.err (%p70)
  %s73 = scalar_lea.sflag [#allocation3], 1
  %74 = vsyncmov %s73
  %s75 = vpop.sfrf %74
  %p76 = scmp.eq.s32.totalorder %s75, 0
  %p77 = pneg %p76
  %79 = shalt.err (%p77)
  %s80 = scalar_lea.sflag [#allocation3], 2
  %81 = vsyncmov %s80
  %s82 = vpop.sfrf %81
  %p83 = scmp.eq.s32.totalorder %s82, 0
  %p84 = pneg %p83
  %86 = shalt.err (%p84)
  %s87 = scalar_lea.sflag [#allocation3], 3
  %88 = vsyncmov %s87
  %s89 = vpop.sfrf %88
  %p90 = scmp.eq.s32.totalorder %s89, 0
  %p91 = pneg %p90
  %93 = shalt.err (%p91)
  %s94 = scalar_lea.sflag [#allocation3], 4
  %95 = vsyncmov %s94
  %s96 = vpop.sfrf %95
  %p97 = scmp.eq.s32.totalorder %s96, 0
  %p98 = pneg %p97
  %100 = shalt.err (%p98)
  %s101 = scalar_lea.sflag [#allocation3], 5
  %102 = vsyncmov %s101
  %s103 = vpop.sfrf %102
  %p104 = scmp.eq.s32.totalorder %s103, 0
  %p105 = pneg %p104
  %107 = shalt.err (%p105)
  %s108 = scalar_lea.sflag [#allocation3], 6
  %109 = vsyncmov %s108
  %s110 = vpop.sfrf %109
  %p111 = scmp.eq.s32.totalorder %s110, 0
  %p112 = pneg %p111
  %114 = shalt.err (%p112)
  %s115 = scalar_lea.sflag [#allocation3], 7
  %116 = vsyncmov %s115
  %s117 = vpop.sfrf %116
  %p118 = scmp.eq.s32.totalorder %s117, 0
  %p119 = pneg %p118
  %121 = shalt.err (%p119)
  %s122 = scalar_lea.sflag [#allocation3], 8
  %123 = vsyncmov %s122
  %s124 = vpop.sfrf %123
  %p125 = scmp.eq.s32.totalorder %s124, 0
  %p126 = pneg %p125
  %128 = shalt.err (%p126)
  %s129 = scalar_lea.sflag [#allocation3], 9
  %130 = vsyncmov %s129
  %s131 = vpop.sfrf %130
  %p132 = scmp.eq.s32.totalorder %s131, 0
  %p133 = pneg %p132
  %135 = shalt.err (%p133)
  %s136 = scalar_lea.sflag [#allocation3], 10
  %137 = vsyncmov %s136
  %s138 = vpop.sfrf %137
  %p139 = scmp.eq.s32.totalorder %s138, 0
  %p140 = pneg %p139
  %142 = shalt.err (%p140)
  %s143 = scalar_lea.sflag [#allocation3], 11
  %144 = vsyncmov %s143
  %s145 = vpop.sfrf %144
  %p146 = scmp.eq.s32.totalorder %s145, 0
  %p147 = pneg %p146
  %149 = shalt.err (%p147)
  %s150 = scalar_lea.sflag [#allocation3], 12
  %151 = vsyncmov %s150
  %s152 = vpop.sfrf %151
  %p153 = scmp.eq.s32.totalorder %s152, 0
  %p154 = pneg %p153
  %156 = shalt.err (%p154)
  %s157 = scalar_lea.sflag [#allocation3], 13
  %158 = vsyncmov %s157
  %s159 = vpop.sfrf %158
  %p160 = scmp.eq.s32.totalorder %s159, 0
  %p161 = pneg %p160
  %163 = shalt.err (%p161)
  %s164 = scalar_lea.sflag [#allocation3], 14
  %165 = vsyncmov %s164
  %s166 = vpop.sfrf %165
  %p167 = scmp.eq.s32.totalorder %s166, 0
  %p168 = pneg %p167
  %170 = shalt.err (%p168)
  %s171 = scalar_lea.sflag [#allocation3], 15
  %172 = vsyncmov %s171
  %s173 = vpop.sfrf %172
  %p174 = scmp.eq.s32.totalorder %s173, 0
  %p175 = pneg %p174
  %177 = shalt.err (%p175)

</llo_original>
